<compile_context>
chip_gen: v5e
topology: v5e:2x2
jax: 0.10.0
libtpu: 0.0.40
codegen_flags: <defaults>
</compile_context>

<pallas_src>
import functools
import itertools

import numpy as np
import jax
import jax.numpy as jnp
from jax.experimental import pallas as pl
from jax.experimental.pallas import tpu as pltpu


def _round_up(x, m):
    return ((x + m - 1) // m) * m


TN_REG = 256          # register-blocking chunk (lanes): 2 vregs wide, small live set
TN_MAX = 2048         # DMA tile upper bound (lanes)
MIN_GRID_STEPS = 4    # keep >= this many grid steps when N allows (v7x megacore / pipelining)


# ----------------------------- Pallas kernel --------------------------------
def basis_kernel(mean_ref, coef_ref, x_ref, phi_ref, *, tn_reg):
    # mean_ref: (D, 1)             f32, grid-invariant
    # coef_ref: (D, nb_pad, P+1)   f32, Horner coeffs with 1/var^i folded in,
    #                              zero rows beyond nbasis -> padded Phi rows = 0
    # x_ref:    (D, TN)            f32, x^T tile (samples on lanes)
    # phi_ref:  (nb_pad, TN)       f32, Phi^T tile
    d, tn = x_ref.shape
    _, nb_pad, pp1 = coef_ref.shape

    mean = mean_ref[...]                               # (D, 1), loaded once per tile

    for c in range(tn // tn_reg):                      # static unroll over 256-lane chunks
        lo = c * tn_reg
        # Full-width centering: (D, tn_reg) VPU op, lane-broadcast of mean.
        xm = x_ref[:, lo:lo + tn_reg] - mean           # (D, tn_reg)

        phi = None
        for j in range(d):                             # D is small & static
            xj = xm[j:j + 1, :]                        # (1, tn_reg): sublane-broadcast in FMAs
            # All-f32 VPU Horner: pv = ((c_P*t + c_{P-1})*t + ...)*t + c_0,  t = x_j - mean_j
            pv = jnp.broadcast_to(coef_ref[j, :, pp1 - 1:pp1], (nb_pad, tn_reg))
            for i in range(pp1 - 2, -1, -1):
                pv = pv * xj + coef_ref[j, :, i:i + 1]   # (nb_pad,1) lane-broadcast column
            phi = pv if phi is None else phi * pv        # peeled j=0, no ones init

        # Lane-dense, sublane-aligned store; chunk is retired before the next one.
        phi_ref[:, lo:lo + tn_reg] = phi


# ------------------------------- wrapper -------------------------------------
def _choose_tn(n):
    # Largest multiple of TN_REG <= TN_MAX that still leaves >= MIN_GRID_STEPS
    # grid steps when n is large enough (never below TN_REG).
    cap = _round_up(max(1, -(-n // MIN_GRID_STEPS)), TN_REG)
    return max(TN_REG, min(TN_MAX, cap))


@functools.partial(jax.jit, static_argnames=("transposed_output",))
def basis_layer_pallas(x, mean, var, oneDbasis, idxset, *, transposed_output=False):
    """x:(N,D), mean/var:(D,), oneDbasis:(P+1,P+1), idxset:(nbasis,D).

    Returns Phi:(N, nbasis); with transposed_output=True returns Phi^T:(nbasis, N)
    so the consumer can fold the transpose into its own dot_general."""
    n, d = x.shape
    pp1 = oneDbasis.shape[0]
    nbasis = idxset.shape[0]
    nb_pad = _round_up(nbasis, 8)

    # ---- parameter prep (plain JAX, fused into this jit) ---------------------
    # Fold the idxset gather and 1/var^i into per-dimension Horner coefficients.
    coef = oneDbasis.astype(jnp.float32)[idxset.T]                        # (D, nbasis, P+1)
    inv_var_pow = (1.0 / var.astype(jnp.float32))[:, None] ** \
        jnp.arange(pp1, dtype=jnp.float32)[None, :]                       # (D, P+1)
    coef = coef * inv_var_pow[:, None, :]
    coef = jnp.pad(coef, ((0, 0), (0, nb_pad - nbasis), (0, 0)))          # zero rows
    mean_t = mean.reshape(d, 1).astype(jnp.float32)                       # (D, 1)

    # ---- tiling: N on lanes, pad to a multiple of the tile --------------------
    tn = _choose_tn(n)
    n_pad = _round_up(n, tn)
    x_t = jnp.pad(x.astype(jnp.float32), ((0, n_pad - n), (0, 0))).T      # (D, n_pad)

    phi_t = pl.pallas_call(
        functools.partial(basis_kernel, tn_reg=TN_REG),
        out_shape=jax.ShapeDtypeStruct((nb_pad, n_pad), jnp.float32),
        grid_spec=pltpu.PrefetchScalarGridSpec(
            num_scalar_prefetch=0,
            grid=(n_pad // tn,),
            in_specs=[
                pl.BlockSpec((d, 1), lambda i: (0, 0)),                   # mean (grid-invariant)
                pl.BlockSpec((d, nb_pad, pp1), lambda i: (0, 0, 0)),      # coef (grid-invariant)
                pl.BlockSpec((d, tn), lambda i: (0, i)),                  # x^T tile
            ],
            out_specs=pl.BlockSpec((nb_pad, tn), lambda i: (0, i)),       # Phi^T tile
        ),
        compiler_params=pltpu.CompilerParams(
            dimension_semantics=("parallel",),
            vmem_limit_bytes=32 * 1024 * 1024,     # actual footprint < 1 MiB on every gen
        ),
    )(mean_t, coef, x_t)

    if transposed_output:
        return phi_t[:nbasis, :n]                  # (nbasis, N): no skinny transpose
    return phi_t[:nbasis, :n].T                    # (N, nbasis): module semantics
    # TODO(synk): downstream ASNet layers should consume the transposed output
    # (or a transposed weight) to avoid re-streaming Phi through HBM.


# --------------------------- parameter construction --------------------------
def normal_basis(p):
    """Port of BasisLayer.NormalBasis (Hermite recursion)."""
    B = np.zeros((p + 1, p + 1), dtype=np.float32)
    B[0, 0] = 1.0
    if p >= 1:
        B[1, 1] = 2.0
    for i in range(1, p):
        B[i + 1, 1:i + 2] = 2.0 * B[i, :i + 1]
        B[i + 1, :i] -= 2.0 * i * B[i - 1, :i]
    return jnp.asarray(B)


def total_degree_idxset(d, p):
    """All multi-indices alpha in N^d with |alpha| <= p (deterministic order)."""
    idx = [list(a) for a in itertools.product(range(p + 1), repeat=d) if sum(a) <= p]
    idx.sort(key=lambda a: (sum(a), a))
    return jnp.asarray(idx, dtype=jnp.int32)


# ------------------------------- reference -----------------------------------
def basis_layer_ref(x, mean, var, oneDbasis, idxset):
    xn = (x - mean[None, :]) / var[None, :]
    pp1 = oneDbasis.shape[0]
    x_pows = jnp.stack([xn ** i for i in range(pp1)], axis=-1)            # (N, D, P+1)
    # Pure f32 multiply + sum (no MXU) so the reference itself is full precision.
    polyval = jnp.sum(x_pows[:, :, None, :] * oneDbasis[None, None, :, :], axis=-1)
    n, d = x.shape
    phi = jnp.ones((n, idxset.shape[0]), dtype=jnp.float32)
    for j in range(d):
        phi = phi * polyval[:, j, idxset[:, j]]
    return phi


# --------------------------------- main ---------------------------------------
if __name__ == "__main__":
    # Small, module-consistent shapes: d input dims, degree p, N samples.
    # N deliberately not a multiple of the lane tile to exercise padding.
    d, p, n = 4, 3, 1000

    key = jax.random.PRNGKey(0)
    kx, km, kv = jax.random.split(key, 3)
    x = jax.random.normal(kx, (n, d), dtype=jnp.float32)

    # Deterministic non-trainable "PCE_model" parameters.
    mean = 0.1 * jax.random.normal(km, (d,), dtype=jnp.float32)
    var = 1.0 + 0.5 * jax.nn.sigmoid(jax.random.normal(kv, (d,), dtype=jnp.float32))
    oneDbasis = normal_basis(p)                        # (p+1, p+1)
    idxset = total_degree_idxset(d, p)                 # (nbasis, d), nbasis = C(d+p, d) = 35

    phi = basis_layer_pallas(x, mean, var, oneDbasis, idxset)
    jax.block_until_ready(phi)

    phi_ref = basis_layer_ref(x, mean, var, oneDbasis, idxset)
    assert phi.shape == (n, idxset.shape[0])
    assert jnp.allclose(phi, phi_ref, rtol=1e-4, atol=1e-4), "mismatch vs reference"

    # Layout-preserving path (consumer folds the transpose into its own matmul).
    phi_t = basis_layer_pallas(x, mean, var, oneDbasis, idxset, transposed_output=True)
    jax.block_until_ready(phi_t)
    assert phi_t.shape == (idxset.shape[0], n)
    assert jnp.allclose(phi_t.T, phi_ref, rtol=1e-4, atol=1e-4), "mismatch (transposed path)"

    print("KERNEL_OK")
</pallas_src>

<mosaic_0001>
module attributes {stable_mosaic.version = 11 : i64} {
  func.func @basis_kernel(%arg0: i32, %arg1: memref<4x1xf32, #tpu.memory_space<vmem>>, %arg2: memref<4x40x4xf32, #tpu.memory_space<vmem>>, %arg3: memref<4x256xf32, #tpu.memory_space<vmem>>, %arg4: memref<40x256xf32, #tpu.memory_space<vmem>>) attributes {dimension_semantics = [#tpu.dimension_semantics<parallel>], iteration_bounds = array<i64: 4>, scalar_prefetch = 0 : i64, scratch_operands = 0 : i64, tpu.core_type = #tpu.core_type<tc>, window_params = [{pipeline_mode = #tpu.pipeline_mode<synchronous>, transform_indices = @transform_0, window_bounds = array<i64: 4, 1>}, {pipeline_mode = #tpu.pipeline_mode<synchronous>, transform_indices = @transform_1, window_bounds = array<i64: 4, 40, 4>}, {transform_indices = @transform_2, window_bounds = array<i64: 4, 256>}, {transform_indices = @transform_3, window_bounds = array<i64: 40, 256>}]} {
    %c0 = arith.constant 0 : index
    %c0_0 = arith.constant 0 : index
    %0 = vector.load %arg1[%c0, %c0_0] : memref<4x1xf32, #tpu.memory_space<vmem>>, vector<4x1xf32>
    %c0_1 = arith.constant 0 : index
    %c0_2 = arith.constant 0 : index
    %1 = vector.load %arg3[%c0_1, %c0_2] : memref<4x256xf32, #tpu.memory_space<vmem>>, vector<4x256xf32>
    %2 = vector.broadcast %0 : vector<4x1xf32> to vector<4x256xf32>
    %3 = arith.subf %1, %2 : vector<4x256xf32>
    %4 = vector.extract_strided_slice %3 {offsets = [0, 0], sizes = [1, 256], strides = [1, 1]} : vector<4x256xf32> to vector<1x256xf32>
    %c0_3 = arith.constant 0 : index
    %c0_4 = arith.constant 0 : index
    %c3 = arith.constant 3 : index
    %5 = vector.load %arg2[%c0_3, %c0_4, %c3] : memref<4x40x4xf32, #tpu.memory_space<vmem>>, vector<1x40x1xf32>
    %6 = vector.shape_cast %5 : vector<1x40x1xf32> to vector<40x1xf32>
    %7 = vector.shape_cast %6 : vector<40x1xf32> to vector<40x1xf32>
    %8 = vector.broadcast %7 : vector<40x1xf32> to vector<40x256xf32>
    %9 = vector.broadcast %4 : vector<1x256xf32> to vector<40x256xf32>
    %10 = arith.mulf %8, %9 : vector<40x256xf32>
    %c0_5 = arith.constant 0 : index
    %c0_6 = arith.constant 0 : index
    %c2 = arith.constant 2 : index
    %11 = vector.load %arg2[%c0_5, %c0_6, %c2] : memref<4x40x4xf32, #tpu.memory_space<vmem>>, vector<1x40x1xf32>
    %12 = vector.shape_cast %11 : vector<1x40x1xf32> to vector<40x1xf32>
    %13 = vector.broadcast %12 : vector<40x1xf32> to vector<40x256xf32>
    %14 = arith.addf %10, %13 : vector<40x256xf32>
    %15 = vector.broadcast %4 : vector<1x256xf32> to vector<40x256xf32>
    %16 = arith.mulf %14, %15 : vector<40x256xf32>
    %c0_7 = arith.constant 0 : index
    %c0_8 = arith.constant 0 : index
    %c1 = arith.constant 1 : index
    %17 = vector.load %arg2[%c0_7, %c0_8, %c1] : memref<4x40x4xf32, #tpu.memory_space<vmem>>, vector<1x40x1xf32>
    %18 = vector.shape_cast %17 : vector<1x40x1xf32> to vector<40x1xf32>
    %19 = vector.broadcast %18 : vector<40x1xf32> to vector<40x256xf32>
    %20 = arith.addf %16, %19 : vector<40x256xf32>
    %21 = vector.broadcast %4 : vector<1x256xf32> to vector<40x256xf32>
    %22 = arith.mulf %20, %21 : vector<40x256xf32>
    %c0_9 = arith.constant 0 : index
    %c0_10 = arith.constant 0 : index
    %c0_11 = arith.constant 0 : index
    %23 = vector.load %arg2[%c0_9, %c0_10, %c0_11] : memref<4x40x4xf32, #tpu.memory_space<vmem>>, vector<1x40x1xf32>
    %24 = vector.shape_cast %23 : vector<1x40x1xf32> to vector<40x1xf32>
    %25 = vector.broadcast %24 : vector<40x1xf32> to vector<40x256xf32>
    %26 = arith.addf %22, %25 : vector<40x256xf32>
    %27 = vector.extract_strided_slice %3 {offsets = [1, 0], sizes = [1, 256], strides = [1, 1]} : vector<4x256xf32> to vector<1x256xf32>
    %c1_12 = arith.constant 1 : index
    %c0_13 = arith.constant 0 : index
    %c3_14 = arith.constant 3 : index
    %28 = vector.load %arg2[%c1_12, %c0_13, %c3_14] : memref<4x40x4xf32, #tpu.memory_space<vmem>>, vector<1x40x1xf32>
    %29 = vector.shape_cast %28 : vector<1x40x1xf32> to vector<40x1xf32>
    %30 = vector.shape_cast %29 : vector<40x1xf32> to vector<40x1xf32>
    %31 = vector.broadcast %30 : vector<40x1xf32> to vector<40x256xf32>
    %32 = vector.broadcast %27 : vector<1x256xf32> to vector<40x256xf32>
    %33 = arith.mulf %31, %32 : vector<40x256xf32>
    %c1_15 = arith.constant 1 : index
    %c0_16 = arith.constant 0 : index
    %c2_17 = arith.constant 2 : index
    %34 = vector.load %arg2[%c1_15, %c0_16, %c2_17] : memref<4x40x4xf32, #tpu.memory_space<vmem>>, vector<1x40x1xf32>
    %35 = vector.shape_cast %34 : vector<1x40x1xf32> to vector<40x1xf32>
    %36 = vector.broadcast %35 : vector<40x1xf32> to vector<40x256xf32>
    %37 = arith.addf %33, %36 : vector<40x256xf32>
    %38 = vector.broadcast %27 : vector<1x256xf32> to vector<40x256xf32>
    %39 = arith.mulf %37, %38 : vector<40x256xf32>
    %c1_18 = arith.constant 1 : index
    %c0_19 = arith.constant 0 : index
    %c1_20 = arith.constant 1 : index
    %40 = vector.load %arg2[%c1_18, %c0_19, %c1_20] : memref<4x40x4xf32, #tpu.memory_space<vmem>>, vector<1x40x1xf32>
    %41 = vector.shape_cast %40 : vector<1x40x1xf32> to vector<40x1xf32>
    %42 = vector.broadcast %41 : vector<40x1xf32> to vector<40x256xf32>
    %43 = arith.addf %39, %42 : vector<40x256xf32>
    %44 = vector.broadcast %27 : vector<1x256xf32> to vector<40x256xf32>
    %45 = arith.mulf %43, %44 : vector<40x256xf32>
    %c1_21 = arith.constant 1 : index
    %c0_22 = arith.constant 0 : index
    %c0_23 = arith.constant 0 : index
    %46 = vector.load %arg2[%c1_21, %c0_22, %c0_23] : memref<4x40x4xf32, #tpu.memory_space<vmem>>, vector<1x40x1xf32>
    %47 = vector.shape_cast %46 : vector<1x40x1xf32> to vector<40x1xf32>
    %48 = vector.broadcast %47 : vector<40x1xf32> to vector<40x256xf32>
    %49 = arith.addf %45, %48 : vector<40x256xf32>
    %50 = arith.mulf %26, %49 : vector<40x256xf32>
    %51 = vector.extract_strided_slice %3 {offsets = [2, 0], sizes = [1, 256], strides = [1, 1]} : vector<4x256xf32> to vector<1x256xf32>
    %c2_24 = arith.constant 2 : index
    %c0_25 = arith.constant 0 : index
    %c3_26 = arith.constant 3 : index
    %52 = vector.load %arg2[%c2_24, %c0_25, %c3_26] : memref<4x40x4xf32, #tpu.memory_space<vmem>>, vector<1x40x1xf32>
    %53 = vector.shape_cast %52 : vector<1x40x1xf32> to vector<40x1xf32>
    %54 = vector.shape_cast %53 : vector<40x1xf32> to vector<40x1xf32>
    %55 = vector.broadcast %54 : vector<40x1xf32> to vector<40x256xf32>
    %56 = vector.broadcast %51 : vector<1x256xf32> to vector<40x256xf32>
    %57 = arith.mulf %55, %56 : vector<40x256xf32>
    %c2_27 = arith.constant 2 : index
    %c0_28 = arith.constant 0 : index
    %c2_29 = arith.constant 2 : index
    %58 = vector.load %arg2[%c2_27, %c0_28, %c2_29] : memref<4x40x4xf32, #tpu.memory_space<vmem>>, vector<1x40x1xf32>
    %59 = vector.shape_cast %58 : vector<1x40x1xf32> to vector<40x1xf32>
    %60 = vector.broadcast %59 : vector<40x1xf32> to vector<40x256xf32>
    %61 = arith.addf %57, %60 : vector<40x256xf32>
    %62 = vector.broadcast %51 : vector<1x256xf32> to vector<40x256xf32>
    %63 = arith.mulf %61, %62 : vector<40x256xf32>
    %c2_30 = arith.constant 2 : index
    %c0_31 = arith.constant 0 : index
    %c1_32 = arith.constant 1 : index
    %64 = vector.load %arg2[%c2_30, %c0_31, %c1_32] : memref<4x40x4xf32, #tpu.memory_space<vmem>>, vector<1x40x1xf32>
    %65 = vector.shape_cast %64 : vector<1x40x1xf32> to vector<40x1xf32>
    %66 = vector.broadcast %65 : vector<40x1xf32> to vector<40x256xf32>
    %67 = arith.addf %63, %66 : vector<40x256xf32>
    %68 = vector.broadcast %51 : vector<1x256xf32> to vector<40x256xf32>
    %69 = arith.mulf %67, %68 : vector<40x256xf32>
    %c2_33 = arith.constant 2 : index
    %c0_34 = arith.constant 0 : index
    %c0_35 = arith.constant 0 : index
    %70 = vector.load %arg2[%c2_33, %c0_34, %c0_35] : memref<4x40x4xf32, #tpu.memory_space<vmem>>, vector<1x40x1xf32>
    %71 = vector.shape_cast %70 : vector<1x40x1xf32> to vector<40x1xf32>
    %72 = vector.broadcast %71 : vector<40x1xf32> to vector<40x256xf32>
    %73 = arith.addf %69, %72 : vector<40x256xf32>
    %74 = arith.mulf %50, %73 : vector<40x256xf32>
    %75 = vector.extract_strided_slice %3 {offsets = [3, 0], sizes = [1, 256], strides = [1, 1]} : vector<4x256xf32> to vector<1x256xf32>
    %c3_36 = arith.constant 3 : index
    %c0_37 = arith.constant 0 : index
    %c3_38 = arith.constant 3 : index
    %76 = vector.load %arg2[%c3_36, %c0_37, %c3_38] : memref<4x40x4xf32, #tpu.memory_space<vmem>>, vector<1x40x1xf32>
    %77 = vector.shape_cast %76 : vector<1x40x1xf32> to vector<40x1xf32>
    %78 = vector.shape_cast %77 : vector<40x1xf32> to vector<40x1xf32>
    %79 = vector.broadcast %78 : vector<40x1xf32> to vector<40x256xf32>
    %80 = vector.broadcast %75 : vector<1x256xf32> to vector<40x256xf32>
    %81 = arith.mulf %79, %80 : vector<40x256xf32>
    %c3_39 = arith.constant 3 : index
    %c0_40 = arith.constant 0 : index
    %c2_41 = arith.constant 2 : index
    %82 = vector.load %arg2[%c3_39, %c0_40, %c2_41] : memref<4x40x4xf32, #tpu.memory_space<vmem>>, vector<1x40x1xf32>
    %83 = vector.shape_cast %82 : vector<1x40x1xf32> to vector<40x1xf32>
    %84 = vector.broadcast %83 : vector<40x1xf32> to vector<40x256xf32>
    %85 = arith.addf %81, %84 : vector<40x256xf32>
    %86 = vector.broadcast %75 : vector<1x256xf32> to vector<40x256xf32>
    %87 = arith.mulf %85, %86 : vector<40x256xf32>
    %c3_42 = arith.constant 3 : index
    %c0_43 = arith.constant 0 : index
    %c1_44 = arith.constant 1 : index
    %88 = vector.load %arg2[%c3_42, %c0_43, %c1_44] : memref<4x40x4xf32, #tpu.memory_space<vmem>>, vector<1x40x1xf32>
    %89 = vector.shape_cast %88 : vector<1x40x1xf32> to vector<40x1xf32>
    %90 = vector.broadcast %89 : vector<40x1xf32> to vector<40x256xf32>
    %91 = arith.addf %87, %90 : vector<40x256xf32>
    %92 = vector.broadcast %75 : vector<1x256xf32> to vector<40x256xf32>
    %93 = arith.mulf %91, %92 : vector<40x256xf32>
    %c3_45 = arith.constant 3 : index
    %c0_46 = arith.constant 0 : index
    %c0_47 = arith.constant 0 : index
    %94 = vector.load %arg2[%c3_45, %c0_46, %c0_47] : memref<4x40x4xf32, #tpu.memory_space<vmem>>, vector<1x40x1xf32>
    %95 = vector.shape_cast %94 : vector<1x40x1xf32> to vector<40x1xf32>
    %96 = vector.broadcast %95 : vector<40x1xf32> to vector<40x256xf32>
    %97 = arith.addf %93, %96 : vector<40x256xf32>
    %98 = arith.mulf %74, %97 : vector<40x256xf32>
    %c0_48 = arith.constant 0 : index
    %c0_49 = arith.constant 0 : index
    %99 = vector.load %arg4[%c0_48, %c0_49] : memref<40x256xf32, #tpu.memory_space<vmem>>, vector<40x256xf32>
    tpu.vector_store %arg4[%c0_48, %c0_49], %98 {strides = array<i32>} : memref<40x256xf32, #tpu.memory_space<vmem>>, vector<40x256xf32>,
    return
  }
  func.func @transform_0(%arg0: i32) -> (i32, i32) {
    %c0_i32 = arith.constant 0 : i32
    %c0_i32_0 = arith.constant 0 : i32
    %c0_i32_1 = arith.constant 0 : i32
    return %c0_i32, %c0_i32_0 : i32, i32
  }
  func.func @transform_1(%arg0: i32) -> (i32, i32, i32) {
    %c0_i32 = arith.constant 0 : i32
    %c0_i32_0 = arith.constant 0 : i32
    %c0_i32_1 = arith.constant 0 : i32
    %c0_i32_2 = arith.constant 0 : i32
    return %c0_i32, %c0_i32_0, %c0_i32_1 : i32, i32, i32
  }
  func.func @transform_2(%arg0: i32) -> (i32, i32) {
    %c0_i32 = arith.constant 0 : i32
    %c0_i32_0 = arith.constant 0 : i32
    return %c0_i32, %arg0 : i32, i32
  }
  func.func @transform_3(%arg0: i32) -> (i32, i32) {
    %c0_i32 = arith.constant 0 : i32
    %c0_i32_0 = arith.constant 0 : i32
    return %c0_i32, %arg0 : i32, i32
  }
}

</mosaic_0001>

<llo_original>
// kernel: basis_layer_pallas.1
$region0: #{basis_layer_pallas.1}
  #allocation0 [shape = 'u32[]', space=smem, size = 0x4, offset = 0x4, fixed_abs, tag = 'smem constant byte address 0x4 - core index']
  #allocation1 [shape = 'u32[72,128]{1,0:T(1,128)}', space=vmem, size = 0x9000, scoped, tag = 'internal scratch']
  %s0 = inlined_call_operand.vmem [shape: f32[4,1], index: 0, kind: input, shape index: {}]
  %s1 = inlined_call_operand.vmem [shape: f32[4,40,4], index: 1, kind: input, shape index: {}]
  %s2 = inlined_call_operand.vmem [shape: f32[4,1024], index: 2, kind: input, shape index: {}]
  %s3 = inlined_call_operand.vmem [shape: f32[40,1024], index: 3, kind: output, shape index: {}]
  %s4 = sld [smem:[#allocation0]]
  $region64: #{basis_layer_pallas.1} parent=0
    _
  %s6 = ssub.s32 1, %s4
  %s7 = scalar_select 0, %s6, %s4
  $region1: #{basis_layer_pallas.1} parent=0
    #allocation2 [shape = 'u8[81920]{0}', space=vmem, size = 0x14000, scoped, tag = 'output window, operand 0']
    loop: start=0, step=1, limit=6
    $region2: #{basis_layer_pallas.1} parent=1 // loop_pre_header
      _
    $region3: #{basis_layer_pallas.1} parent=1 // loop_header
      %s9 = sphi 0, %s13
      %p10 = scmp.ge.s32.totalorder %s9, 6
      %s17 = sphi 0, %s17
      %s19 = sphi 0, %s17
      %s20 = sphi 0, %s19
      %s34 = sphi 0, %s20
      %s38 = sphi 0, %s38
      %s40 = sphi 0, %s38
      %s41 = sphi 0, %s40
      %s55 = sphi 0, %s41
      %s61 = sphi 0, %s63
      %s64 = sphi 0, %s61
      %s65 = sphi 0, %s64
      %s81 = sphi 0, %s65
      %s87 = sphi 0, %s89
      %s90 = sphi 0, %s87
      %s91 = sphi 0, %s90
      %s107 = sphi 0, %s91
    $region4: #{basis_layer_pallas.1} parent=1 // loop_header_branch
      %12 = sbr.rel (%p10) target = $region8
    $region5: #{basis_layer_pallas.1} parent=1 // loop_body
      %s14 = ssub.s32 %s9, 1
      %s15 = ssub.s32 %s9, 2
      %s16 = sadd.s32 %s9, 1
      %s18 = sadd.s32 %s17, 1
      %p21 = scmp.eq.s32.totalorder %s9, 3
      %p22 = scmp.ne.s32.totalorder %s17, %s19
      %p23 = scmp.eq.s32.totalorder %s9, 0
      %p24 = por %p22, %p23
      %p25 = scmp.ne.s32.totalorder %s17, %s19
      %p26 = scmp.eq.s32.totalorder %s14, 3
      %p27 = por %p25, %p26
      %p28 = scmp.ne.s32.totalorder %s19, %s20
      %p29 = scmp.eq.s32.totalorder %s14, 0
      %p30 = por %p28, %p29
      %p31 = scmp.ne.s32.totalorder %s19, %s20
      %p32 = scmp.eq.s32.totalorder %s15, 3
      %p33 = por %p31, %p32
      %p35 = scmp.ne.s32.totalorder %s20, %s34
      %p36 = scmp.eq.s32.totalorder %s15, 0
      %p37 = por %p35, %p36
      %s39 = sadd.s32 %s38, 1
      %p42 = scmp.eq.s32.totalorder %s9, 3
      %p43 = scmp.ne.s32.totalorder %s38, %s40
      %p44 = scmp.eq.s32.totalorder %s9, 0
      %p45 = por %p43, %p44
      %p46 = scmp.ne.s32.totalorder %s38, %s40
      %p47 = scmp.eq.s32.totalorder %s14, 3
      %p48 = por %p46, %p47
      %p49 = scmp.ne.s32.totalorder %s40, %s41
      %p50 = scmp.eq.s32.totalorder %s14, 0
      %p51 = por %p49, %p50
      %p52 = scmp.ne.s32.totalorder %s40, %s41
      %p53 = scmp.eq.s32.totalorder %s15, 3
      %p54 = por %p52, %p53
      %p56 = scmp.ne.s32.totalorder %s41, %s55
      %p57 = scmp.eq.s32.totalorder %s15, 0
      %p58 = por %p56, %p57
      %s59 = ssub.s32 %s9, %s16
      %p60 = scmp.eq.s32.totalorder %s59, 0
      %s62 = sadd.s32 %s61, 1
      %s63 = scalar_select %p60, %s61, %s62
      %p66 = pneg %p60
      %p67 = scmp.eq.s32.totalorder %s9, 3
      %p68 = por %p66, %p67
      %p69 = scmp.ne.s32.totalorder %s61, %s64
      %p70 = scmp.eq.s32.totalorder %s9, 0
      %p71 = por %p69, %p70
      %p72 = scmp.ne.s32.totalorder %s61, %s64
      %p73 = scmp.eq.s32.totalorder %s14, 3
      %p74 = por %p72, %p73
      %p75 = scmp.ne.s32.totalorder %s64, %s65
      %p76 = scmp.eq.s32.totalorder %s14, 0
      %p77 = por %p75, %p76
      %p78 = scmp.ne.s32.totalorder %s64, %s65
      %p79 = scmp.eq.s32.totalorder %s15, 3
      %p80 = por %p78, %p79
      %p82 = scmp.ne.s32.totalorder %s65, %s81
      %p83 = scmp.eq.s32.totalorder %s15, 0
      %p84 = por %p82, %p83
      %s85 = ssub.s32 %s9, %s16
      %p86 = scmp.eq.s32.totalorder %s85, 0
      %s88 = sadd.s32 %s87, 1
      %s89 = scalar_select %p86, %s87, %s88
      %p92 = pneg %p86
      %p93 = scmp.eq.s32.totalorder %s9, 3
      %p94 = por %p92, %p93
      %p95 = scmp.ne.s32.totalorder %s87, %s90
      %p96 = scmp.eq.s32.totalorder %s9, 0
      %p97 = por %p95, %p96
      %p98 = scmp.ne.s32.totalorder %s87, %s90
      %p99 = scmp.eq.s32.totalorder %s14, 3
      %p100 = por %p98, %p99
      %p101 = scmp.ne.s32.totalorder %s90, %s91
      %p102 = scmp.eq.s32.totalorder %s14, 0
      %p103 = por %p101, %p102
      %p104 = scmp.ne.s32.totalorder %s90, %s91
      %p105 = scmp.eq.s32.totalorder %s15, 3
      %p106 = por %p104, %p105
      %p108 = scmp.ne.s32.totalorder %s91, %s107
      %p109 = scmp.eq.s32.totalorder %s15, 0
      %p110 = por %p108, %p109
      %p111 = scmp.le.s32.totalorder 1, %s9
      %p112 = scmp.lt.s32.totalorder %s9, 5
      %p113 = pnand %p111, %p112
      %p114 = pneg %p113
      // Predicated region
      $region9: #{basis_layer_pallas.1} parent=5 // pred_check
        _
      $region10: #{basis_layer_pallas.1} parent=5 // pred_check_branch
        %116 = sbr.rel (%p113) target = $region12
      $region11: #{basis_layer_pallas.1} parent=5 // pred_region
        %s117 = ssub.s32 %s9, 1
        // Predicated region
        $region13: #{basis_layer_pallas.1} parent=11 // pred_check
          %p118 = pneg %p30
        $region14: #{basis_layer_pallas.1} parent=11 // pred_check_branch
          %120 = sbr.rel (%p118) target = $region16
        $region15: #{basis_layer_pallas.1} parent=11 // pred_region
          _
        $region16: #{basis_layer_pallas.1} parent=11 // pred_fallthru
          _
        // Predicated region
        $region17: #{basis_layer_pallas.1} parent=11 // pred_check
          %p121 = pneg %p51
        $region18: #{basis_layer_pallas.1} parent=11 // pred_check_branch
          %123 = sbr.rel (%p121) target = $region20
        $region19: #{basis_layer_pallas.1} parent=11 // pred_region
          _
        $region20: #{basis_layer_pallas.1} parent=11 // pred_fallthru
          _
      $region12: #{basis_layer_pallas.1} parent=5 // pred_fallthru
        _
      %p124 = scmp.lt.s32.totalorder %s9, 4
      // Predicated region
      $region21: #{basis_layer_pallas.1} parent=5 // pred_check
        %p125 = pneg %p124
      $region22: #{basis_layer_pallas.1} parent=5 // pred_check_branch
        %127 = sbr.rel (%p125) target = $region24
      $region23: #{basis_layer_pallas.1} parent=5 // pred_region
        // Predicated region
        $region25: #{basis_layer_pallas.1} parent=23 // pred_check
          %p128 = pneg %p71
        $region26: #{basis_layer_pallas.1} parent=23 // pred_check_branch
          %130 = sbr.rel (%p128) target = $region28
        $region27: #{basis_layer_pallas.1} parent=23 // pred_region
          %s131 = smul.u32 2, %s9
          %p132 = scmp.lt.s32.totalorder %s131, 7
          %s133 = scalar_select %p132, %s131, 7
          %s134 = smul.addr %s133, 4
          %s135 = scalar_lea.vmem %s2, %s134
          %s136 = smul.u32 2, %s9
        $region28: #{basis_layer_pallas.1} parent=23 // pred_fallthru
          _
      $region24: #{basis_layer_pallas.1} parent=5 // pred_fallthru
        _
      %p137 = scmp.le.s32.totalorder 1, %s9
      %p138 = scmp.lt.s32.totalorder %s9, 5
      %p139 = pnand %p137, %p138
      %p140 = pneg %p139
      // Predicated region
      $region29: #{basis_layer_pallas.1} parent=5 // pred_check
        _
      $region30: #{basis_layer_pallas.1} parent=5 // pred_check_branch
        %142 = sbr.rel (%p139) target = $region32
      $region31: #{basis_layer_pallas.1} parent=5 // pred_region
        %s143 = ssub.s32 %s9, 1
        %p144 = pneg %p30
        %p145 = pneg %p27
        %p146 = pneg %p51
        %p147 = pneg %p48
        %s148 = smul.u32 2, %s14
        %p149 = scmp.lt.s32.totalorder %s148, 7
        %s150 = scalar_select %p149, %s148, 7
        %s151 = smul.addr %s150, 4
        %s152 = scalar_lea.vmem %s2, %s151
        %p153 = pneg %p77
        %p154 = pneg %p74
        %p155 = pneg %p103
        %p156 = pneg %p100
        %s157 = sand.u32 %s90, 1
        %s158 = sand.u32 %s90, 1
        %s159 = smul.addr %s158, 80
        %s160 = scalar_lea.vmem [#allocation2], %s159
        %s161 = smul.u32 2, %s14
        %p162 = scmp.lt.s32.totalorder %s161, 7
        %s163 = scalar_select %p162, %s161, 7
        %s164 = smul.addr %s163, 4
        %s165 = scalar_lea.vmem %s2, %s164
        %s166 = smul.u32 2, %s14
        %s167 = smul.u32 2, %s14
        %v168 = vld [vmem:[%s0] sm:$0xf]
        %v169 = vld [vmem:[%s165] sm:$0xff]
        %171 = vset.pattern.permute.xlu0 0
        %172 = vperm.xlu0 %171, %v168
        %v173 = vpop.permute.xlu0 %172
        %v175 = vunpack.c.l.s4 839922192
        %v176 = vunpack.c.0.s8 %v175
        %v177 = vperm.slane %v173, %v176
        %v179 = vsub.f32 %v169, %v177
        %v180 = vld [vmem:[%s1] sm:$0xff]
        %v181 = vld [vmem:[%s1 + $0x8] sm:$0xff]
        %v182 = vld [vmem:[%s1 + $0x10] sm:$0xff]
        %v183 = vld [vmem:[%s1 + $0x18] sm:$0xff]
        %v184 = vld [vmem:[%s1 + $0x20] sm:$0xff]
        %186 = vset.pattern.permute.xlu0 3
        %187 = vperm.xlu0 %186, %v180
        %v188 = vpop.permute.xlu0 %187
        %191 = vset.pattern.permute.xlu0 3
        %192 = vperm.xlu0 %191, %v181
        %v193 = vpop.permute.xlu0 %192
        %196 = vset.pattern.permute.xlu0 3
        %197 = vperm.xlu0 %196, %v182
        %v198 = vpop.permute.xlu0 %197
        %201 = vset.pattern.permute.xlu0 3
        %202 = vperm.xlu0 %201, %v183
        %v203 = vpop.permute.xlu0 %202
        %206 = vset.pattern.permute.xlu0 3
        %207 = vperm.xlu0 %206, %v184
        %v208 = vpop.permute.xlu0 %207
        %v211 = vperm.slane %v179, 0
        %v212 = vperm.slane %v179, 4
        %v215 = vperm.slane %v211, 0
        %v216 = vperm.slane %v212, 0
        %v217 = vmul.f32 %v188, %v215
        %v218 = vmul.f32 %v188, %v216
        %v219 = vmul.f32 %v193, %v215
        %v220 = vmul.f32 %v193, %v216
        %v221 = vmul.f32 %v198, %v215
        %v222 = vmul.f32 %v198, %v216
        %v223 = vmul.f32 %v203, %v215
        %v224 = vmul.f32 %v203, %v216
        %v225 = vmul.f32 %v208, %v215
        %v226 = vmul.f32 %v208, %v216
        %227 = vset.pattern.permute.xlu0 2
        %228 = vperm.xlu0 %227, %v180
        %v229 = vpop.permute.xlu0 %228
        %231 = vset.pattern.permute.xlu0 2
        %232 = vperm.xlu0 %231, %v181
        %v233 = vpop.permute.xlu0 %232
        %235 = vset.pattern.permute.xlu0 2
        %236 = vperm.xlu0 %235, %v182
        %v237 = vpop.permute.xlu0 %236
        %239 = vset.pattern.permute.xlu0 2
        %240 = vperm.xlu0 %239, %v183
        %v241 = vpop.permute.xlu0 %240
        %243 = vset.pattern.permute.xlu0 2
        %244 = vperm.xlu0 %243, %v184
        %v245 = vpop.permute.xlu0 %244
        %v247 = vadd.f32 %v217, %v229
        %v248 = vadd.f32 %v218, %v229
        %v249 = vadd.f32 %v219, %v233
        %v250 = vadd.f32 %v220, %v233
        %v251 = vadd.f32 %v221, %v237
        %v252 = vadd.f32 %v222, %v237
        %v253 = vadd.f32 %v223, %v241
        %v254 = vadd.f32 %v224, %v241
        %v255 = vadd.f32 %v225, %v245
        %v256 = vadd.f32 %v226, %v245
        %v257 = vmul.f32 %v247, %v215
        %v258 = vmul.f32 %v248, %v216
        %v259 = vmul.f32 %v249, %v215
        %v260 = vmul.f32 %v250, %v216
        %v261 = vmul.f32 %v251, %v215
        %v262 = vmul.f32 %v252, %v216
        %v263 = vmul.f32 %v253, %v215
        %v264 = vmul.f32 %v254, %v216
        %v265 = vmul.f32 %v255, %v215
        %v266 = vmul.f32 %v256, %v216
        %267 = vset.pattern.permute.xlu0 1
        %268 = vperm.xlu0 %267, %v180
        %v269 = vpop.permute.xlu0 %268
        %271 = vset.pattern.permute.xlu0 1
        %272 = vperm.xlu0 %271, %v181
        %v273 = vpop.permute.xlu0 %272
        %275 = vset.pattern.permute.xlu0 1
        %276 = vperm.xlu0 %275, %v182
        %v277 = vpop.permute.xlu0 %276
        %279 = vset.pattern.permute.xlu0 1
        %280 = vperm.xlu0 %279, %v183
        %v281 = vpop.permute.xlu0 %280
        %283 = vset.pattern.permute.xlu0 1
        %284 = vperm.xlu0 %283, %v184
        %v285 = vpop.permute.xlu0 %284
        %v287 = vadd.f32 %v257, %v269
        %v288 = vadd.f32 %v258, %v269
        %v289 = vadd.f32 %v259, %v273
        %v290 = vadd.f32 %v260, %v273
        %v291 = vadd.f32 %v261, %v277
        %v292 = vadd.f32 %v262, %v277
        %v293 = vadd.f32 %v263, %v281
        %v294 = vadd.f32 %v264, %v281
        %v295 = vadd.f32 %v265, %v285
        %v296 = vadd.f32 %v266, %v285
        %v297 = vmul.f32 %v287, %v215
        %v298 = vmul.f32 %v288, %v216
        %v299 = vmul.f32 %v289, %v215
        %v300 = vmul.f32 %v290, %v216
        %v301 = vmul.f32 %v291, %v215
        %v302 = vmul.f32 %v292, %v216
        %v303 = vmul.f32 %v293, %v215
        %v304 = vmul.f32 %v294, %v216
        %v305 = vmul.f32 %v295, %v215
        %v306 = vmul.f32 %v296, %v216
        %307 = vset.pattern.permute.xlu0 0
        %308 = vperm.xlu0 %307, %v180
        %v309 = vpop.permute.xlu0 %308
        %311 = vset.pattern.permute.xlu0 0
        %312 = vperm.xlu0 %311, %v181
        %v313 = vpop.permute.xlu0 %312
        %315 = vset.pattern.permute.xlu0 0
        %316 = vperm.xlu0 %315, %v182
        %v317 = vpop.permute.xlu0 %316
        %319 = vset.pattern.permute.xlu0 0
        %320 = vperm.xlu0 %319, %v183
        %v321 = vpop.permute.xlu0 %320
        %323 = vset.pattern.permute.xlu0 0
        %324 = vperm.xlu0 %323, %v184
        %v325 = vpop.permute.xlu0 %324
        %v327 = vadd.f32 %v297, %v309
        %v328 = vadd.f32 %v298, %v309
        %v329 = vadd.f32 %v299, %v313
        %v330 = vadd.f32 %v300, %v313
        %v331 = vadd.f32 %v301, %v317
        %v332 = vadd.f32 %v302, %v317
        %v333 = vadd.f32 %v303, %v321
        %v334 = vadd.f32 %v304, %v321
        %v335 = vadd.f32 %v305, %v325
        %v336 = vadd.f32 %v306, %v325
        %s337 = scalar_lea.vmem %s1, 40
        %v338 = vld [vmem:[%s337] sm:$0xff]
        %v339 = vld [vmem:[%s337 + $0x8] sm:$0xff]
        %v340 = vld [vmem:[%s337 + $0x10] sm:$0xff]
        %v341 = vld [vmem:[%s337 + $0x18] sm:$0xff]
        %v342 = vld [vmem:[%s337 + $0x20] sm:$0xff]
        %344 = vset.pattern.permute.xlu0 3
        %345 = vperm.xlu0 %344, %v338
        %v346 = vpop.permute.xlu0 %345
        %349 = vset.pattern.permute.xlu0 3
        %350 = vperm.xlu0 %349, %v339
        %v351 = vpop.permute.xlu0 %350
        %354 = vset.pattern.permute.xlu0 3
        %355 = vperm.xlu0 %354, %v340
        %v356 = vpop.permute.xlu0 %355
        %359 = vset.pattern.permute.xlu0 3
        %360 = vperm.xlu0 %359, %v341
        %v361 = vpop.permute.xlu0 %360
        %364 = vset.pattern.permute.xlu0 3
        %365 = vperm.xlu0 %364, %v342
        %v366 = vpop.permute.xlu0 %365
        %v368 = vperm.slane %v179, 1
        %v369 = vperm.slane %v179, 5
        %v372 = vperm.slane %v368, 1
        %v373 = vperm.slane %v369, 1
        %v374 = vmul.f32 %v346, %v372
        %v375 = vmul.f32 %v346, %v373
        %v376 = vmul.f32 %v351, %v372
        %v377 = vmul.f32 %v351, %v373
        %v378 = vmul.f32 %v356, %v372
        %v379 = vmul.f32 %v356, %v373
        %v380 = vmul.f32 %v361, %v372
        %v381 = vmul.f32 %v361, %v373
        %v382 = vmul.f32 %v366, %v372
        %v383 = vmul.f32 %v366, %v373
        %384 = vset.pattern.permute.xlu0 2
        %385 = vperm.xlu0 %384, %v338
        %v386 = vpop.permute.xlu0 %385
        %388 = vset.pattern.permute.xlu0 2
        %389 = vperm.xlu0 %388, %v339
        %v390 = vpop.permute.xlu0 %389
        %392 = vset.pattern.permute.xlu0 2
        %393 = vperm.xlu0 %392, %v340
        %v394 = vpop.permute.xlu0 %393
        %396 = vset.pattern.permute.xlu0 2
        %397 = vperm.xlu0 %396, %v341
        %v398 = vpop.permute.xlu0 %397
        %400 = vset.pattern.permute.xlu0 2
        %401 = vperm.xlu0 %400, %v342
        %v402 = vpop.permute.xlu0 %401
        %v404 = vadd.f32 %v374, %v386
        %v405 = vadd.f32 %v375, %v386
        %v406 = vadd.f32 %v376, %v390
        %v407 = vadd.f32 %v377, %v390
        %v408 = vadd.f32 %v378, %v394
        %v409 = vadd.f32 %v379, %v394
        %v410 = vadd.f32 %v380, %v398
        %v411 = vadd.f32 %v381, %v398
        %v412 = vadd.f32 %v382, %v402
        %v413 = vadd.f32 %v383, %v402
        %v414 = vmul.f32 %v404, %v372
        %v415 = vmul.f32 %v405, %v373
        %v416 = vmul.f32 %v406, %v372
        %v417 = vmul.f32 %v407, %v373
        %v418 = vmul.f32 %v408, %v372
        %v419 = vmul.f32 %v409, %v373
        %v420 = vmul.f32 %v410, %v372
        %v421 = vmul.f32 %v411, %v373
        %v422 = vmul.f32 %v412, %v372
        %v423 = vmul.f32 %v413, %v373
        %424 = vset.pattern.permute.xlu0 1
        %425 = vperm.xlu0 %424, %v338
        %v426 = vpop.permute.xlu0 %425
        %428 = vset.pattern.permute.xlu0 1
        %429 = vperm.xlu0 %428, %v339
        %v430 = vpop.permute.xlu0 %429
        %432 = vset.pattern.permute.xlu0 1
        %433 = vperm.xlu0 %432, %v340
        %v434 = vpop.permute.xlu0 %433
        %436 = vset.pattern.permute.xlu0 1
        %437 = vperm.xlu0 %436, %v341
        %v438 = vpop.permute.xlu0 %437
        %440 = vset.pattern.permute.xlu0 1
        %441 = vperm.xlu0 %440, %v342
        %v442 = vpop.permute.xlu0 %441
        %v444 = vadd.f32 %v414, %v426
        %v445 = vadd.f32 %v415, %v426
        %v446 = vadd.f32 %v416, %v430
        %v447 = vadd.f32 %v417, %v430
        %v448 = vadd.f32 %v418, %v434
        %v449 = vadd.f32 %v419, %v434
        %v450 = vadd.f32 %v420, %v438
        %v451 = vadd.f32 %v421, %v438
        %v452 = vadd.f32 %v422, %v442
        %v453 = vadd.f32 %v423, %v442
        %v454 = vmul.f32 %v444, %v372
        %v455 = vmul.f32 %v445, %v373
        %v456 = vmul.f32 %v446, %v372
        %v457 = vmul.f32 %v447, %v373
        %v458 = vmul.f32 %v448, %v372
        %v459 = vmul.f32 %v449, %v373
        %v460 = vmul.f32 %v450, %v372
        %v461 = vmul.f32 %v451, %v373
        %v462 = vmul.f32 %v452, %v372
        %v463 = vmul.f32 %v453, %v373
        %464 = vset.pattern.permute.xlu0 0
        %465 = vperm.xlu0 %464, %v338
        %v466 = vpop.permute.xlu0 %465
        %468 = vset.pattern.permute.xlu0 0
        %469 = vperm.xlu0 %468, %v339
        %v470 = vpop.permute.xlu0 %469
        %472 = vset.pattern.permute.xlu0 0
        %473 = vperm.xlu0 %472, %v340
        %v474 = vpop.permute.xlu0 %473
        %476 = vset.pattern.permute.xlu0 0
        %477 = vperm.xlu0 %476, %v341
        %v478 = vpop.permute.xlu0 %477
        %480 = vset.pattern.permute.xlu0 0
        %481 = vperm.xlu0 %480, %v342
        %v482 = vpop.permute.xlu0 %481
        %v484 = vadd.f32 %v454, %v466
        %v485 = vadd.f32 %v455, %v466
        %v486 = vadd.f32 %v456, %v470
        %v487 = vadd.f32 %v457, %v470
        %v488 = vadd.f32 %v458, %v474
        %v489 = vadd.f32 %v459, %v474
        %v490 = vadd.f32 %v460, %v478
        %v491 = vadd.f32 %v461, %v478
        %v492 = vadd.f32 %v462, %v482
        %v493 = vadd.f32 %v463, %v482
        %v494 = vmul.f32 %v327, %v484
        %v495 = vmul.f32 %v328, %v485
        %v496 = vmul.f32 %v329, %v486
        %v497 = vmul.f32 %v330, %v487
        %v498 = vmul.f32 %v331, %v488
        %v499 = vmul.f32 %v332, %v489
        %v500 = vmul.f32 %v333, %v490
        %v501 = vmul.f32 %v334, %v491
        %v502 = vmul.f32 %v335, %v492
        %v503 = vmul.f32 %v336, %v493
        %s504 = scalar_lea.vmem %s1, 80
        %v505 = vld [vmem:[%s504] sm:$0xff]
        %v506 = vld [vmem:[%s504 + $0x8] sm:$0xff]
        %v507 = vld [vmem:[%s504 + $0x10] sm:$0xff]
        %v508 = vld [vmem:[%s504 + $0x18] sm:$0xff]
        %v509 = vld [vmem:[%s504 + $0x20] sm:$0xff]
        %511 = vset.pattern.permute.xlu0 3
        %512 = vperm.xlu0 %511, %v505
        %v513 = vpop.permute.xlu0 %512
        %516 = vset.pattern.permute.xlu0 3
        %517 = vperm.xlu0 %516, %v506
        %v518 = vpop.permute.xlu0 %517
        %521 = vset.pattern.permute.xlu0 3
        %522 = vperm.xlu0 %521, %v507
        %v523 = vpop.permute.xlu0 %522
        %526 = vset.pattern.permute.xlu0 3
        %527 = vperm.xlu0 %526, %v508
        %v528 = vpop.permute.xlu0 %527
        %531 = vset.pattern.permute.xlu0 3
        %532 = vperm.xlu0 %531, %v509
        %v533 = vpop.permute.xlu0 %532
        %v535 = vperm.slane %v179, 2
        %v536 = vperm.slane %v179, 6
        %v539 = vperm.slane %v535, 2
        %v540 = vperm.slane %v536, 2
        %v541 = vmul.f32 %v513, %v539
        %v542 = vmul.f32 %v513, %v540
        %v543 = vmul.f32 %v518, %v539
        %v544 = vmul.f32 %v518, %v540
        %v545 = vmul.f32 %v523, %v539
        %v546 = vmul.f32 %v523, %v540
        %v547 = vmul.f32 %v528, %v539
        %v548 = vmul.f32 %v528, %v540
        %v549 = vmul.f32 %v533, %v539
        %v550 = vmul.f32 %v533, %v540
        %551 = vset.pattern.permute.xlu0 2
        %552 = vperm.xlu0 %551, %v505
        %v553 = vpop.permute.xlu0 %552
        %555 = vset.pattern.permute.xlu0 2
        %556 = vperm.xlu0 %555, %v506
        %v557 = vpop.permute.xlu0 %556
        %559 = vset.pattern.permute.xlu0 2
        %560 = vperm.xlu0 %559, %v507
        %v561 = vpop.permute.xlu0 %560
        %563 = vset.pattern.permute.xlu0 2
        %564 = vperm.xlu0 %563, %v508
        %v565 = vpop.permute.xlu0 %564
        %567 = vset.pattern.permute.xlu0 2
        %568 = vperm.xlu0 %567, %v509
        %v569 = vpop.permute.xlu0 %568
        %v571 = vadd.f32 %v541, %v553
        %v572 = vadd.f32 %v542, %v553
        %v573 = vadd.f32 %v543, %v557
        %v574 = vadd.f32 %v544, %v557
        %v575 = vadd.f32 %v545, %v561
        %v576 = vadd.f32 %v546, %v561
        %v577 = vadd.f32 %v547, %v565
        %v578 = vadd.f32 %v548, %v565
        %v579 = vadd.f32 %v549, %v569
        %v580 = vadd.f32 %v550, %v569
        %v581 = vmul.f32 %v571, %v539
        %v582 = vmul.f32 %v572, %v540
        %v583 = vmul.f32 %v573, %v539
        %v584 = vmul.f32 %v574, %v540
        %v585 = vmul.f32 %v575, %v539
        %v586 = vmul.f32 %v576, %v540
        %v587 = vmul.f32 %v577, %v539
        %v588 = vmul.f32 %v578, %v540
        %v589 = vmul.f32 %v579, %v539
        %v590 = vmul.f32 %v580, %v540
        %591 = vset.pattern.permute.xlu0 1
        %592 = vperm.xlu0 %591, %v505
        %v593 = vpop.permute.xlu0 %592
        %595 = vset.pattern.permute.xlu0 1
        %596 = vperm.xlu0 %595, %v506
        %v597 = vpop.permute.xlu0 %596
        %599 = vset.pattern.permute.xlu0 1
        %600 = vperm.xlu0 %599, %v507
        %v601 = vpop.permute.xlu0 %600
        %603 = vset.pattern.permute.xlu0 1
        %604 = vperm.xlu0 %603, %v508
        %v605 = vpop.permute.xlu0 %604
        %607 = vset.pattern.permute.xlu0 1
        %608 = vperm.xlu0 %607, %v509
        %v609 = vpop.permute.xlu0 %608
        %v611 = vadd.f32 %v581, %v593
        %v612 = vadd.f32 %v582, %v593
        %v613 = vadd.f32 %v583, %v597
        %v614 = vadd.f32 %v584, %v597
        %v615 = vadd.f32 %v585, %v601
        %v616 = vadd.f32 %v586, %v601
        %v617 = vadd.f32 %v587, %v605
        %v618 = vadd.f32 %v588, %v605
        %v619 = vadd.f32 %v589, %v609
        %v620 = vadd.f32 %v590, %v609
        %v621 = vmul.f32 %v611, %v539
        %v622 = vmul.f32 %v612, %v540
        %v623 = vmul.f32 %v613, %v539
        %v624 = vmul.f32 %v614, %v540
        %v625 = vmul.f32 %v615, %v539
        %v626 = vmul.f32 %v616, %v540
        %v627 = vmul.f32 %v617, %v539
        %v628 = vmul.f32 %v618, %v540
        %v629 = vmul.f32 %v619, %v539
        %v630 = vmul.f32 %v620, %v540
        %631 = vset.pattern.permute.xlu0 0
        %632 = vperm.xlu0 %631, %v505
        %v633 = vpop.permute.xlu0 %632
        %635 = vset.pattern.permute.xlu0 0
        %636 = vperm.xlu0 %635, %v506
        %v637 = vpop.permute.xlu0 %636
        %639 = vset.pattern.permute.xlu0 0
        %640 = vperm.xlu0 %639, %v507
        %v641 = vpop.permute.xlu0 %640
        %643 = vset.pattern.permute.xlu0 0
        %644 = vperm.xlu0 %643, %v508
        %v645 = vpop.permute.xlu0 %644
        %647 = vset.pattern.permute.xlu0 0
        %648 = vperm.xlu0 %647, %v509
        %v649 = vpop.permute.xlu0 %648
        %v651 = vadd.f32 %v621, %v633
        %v652 = vadd.f32 %v622, %v633
        %v653 = vadd.f32 %v623, %v637
        %v654 = vadd.f32 %v624, %v637
        %v655 = vadd.f32 %v625, %v641
        %v656 = vadd.f32 %v626, %v641
        %v657 = vadd.f32 %v627, %v645
        %v658 = vadd.f32 %v628, %v645
        %v659 = vadd.f32 %v629, %v649
        %v660 = vadd.f32 %v630, %v649
        %v661 = vmul.f32 %v494, %v651
        %v662 = vmul.f32 %v495, %v652
        %v663 = vmul.f32 %v496, %v653
        %v664 = vmul.f32 %v497, %v654
        %v665 = vmul.f32 %v498, %v655
        %v666 = vmul.f32 %v499, %v656
        %v667 = vmul.f32 %v500, %v657
        %v668 = vmul.f32 %v501, %v658
        %v669 = vmul.f32 %v502, %v659
        %v670 = vmul.f32 %v503, %v660
        %s671 = scalar_lea.vmem %s1, 120
        %v672 = vld [vmem:[%s671] sm:$0xff]
        %v673 = vld [vmem:[%s671 + $0x8] sm:$0xff]
        %v674 = vld [vmem:[%s671 + $0x10] sm:$0xff]
        %v675 = vld [vmem:[%s671 + $0x18] sm:$0xff]
        %v676 = vld [vmem:[%s671 + $0x20] sm:$0xff]
        %678 = vset.pattern.permute.xlu0 3
        %679 = vperm.xlu0 %678, %v672
        %v680 = vpop.permute.xlu0 %679
        %683 = vset.pattern.permute.xlu0 3
        %684 = vperm.xlu0 %683, %v673
        %v685 = vpop.permute.xlu0 %684
        %688 = vset.pattern.permute.xlu0 3
        %689 = vperm.xlu0 %688, %v674
        %v690 = vpop.permute.xlu0 %689
        %693 = vset.pattern.permute.xlu0 3
        %694 = vperm.xlu0 %693, %v675
        %v695 = vpop.permute.xlu0 %694
        %698 = vset.pattern.permute.xlu0 3
        %699 = vperm.xlu0 %698, %v676
        %v700 = vpop.permute.xlu0 %699
        %v702 = vperm.slane %v179, 3
        %v703 = vperm.slane %v179, 7
        %v706 = vperm.slane %v702, 3
        %v707 = vperm.slane %v703, 3
        %v708 = vmul.f32 %v680, %v706
        %v709 = vmul.f32 %v680, %v707
        %v710 = vmul.f32 %v685, %v706
        %v711 = vmul.f32 %v685, %v707
        %v712 = vmul.f32 %v690, %v706
        %v713 = vmul.f32 %v690, %v707
        %v714 = vmul.f32 %v695, %v706
        %v715 = vmul.f32 %v695, %v707
        %v716 = vmul.f32 %v700, %v706
        %v717 = vmul.f32 %v700, %v707
        %718 = vset.pattern.permute.xlu0 2
        %719 = vperm.xlu0 %718, %v672
        %v720 = vpop.permute.xlu0 %719
        %722 = vset.pattern.permute.xlu0 2
        %723 = vperm.xlu0 %722, %v673
        %v724 = vpop.permute.xlu0 %723
        %726 = vset.pattern.permute.xlu0 2
        %727 = vperm.xlu0 %726, %v674
        %v728 = vpop.permute.xlu0 %727
        %730 = vset.pattern.permute.xlu0 2
        %731 = vperm.xlu0 %730, %v675
        %v732 = vpop.permute.xlu0 %731
        %734 = vset.pattern.permute.xlu0 2
        %735 = vperm.xlu0 %734, %v676
        %v736 = vpop.permute.xlu0 %735
        %v738 = vadd.f32 %v708, %v720
        %v739 = vadd.f32 %v709, %v720
        %v740 = vadd.f32 %v710, %v724
        %v741 = vadd.f32 %v711, %v724
        %v742 = vadd.f32 %v712, %v728
        %v743 = vadd.f32 %v713, %v728
        %v744 = vadd.f32 %v714, %v732
        %v745 = vadd.f32 %v715, %v732
        %v746 = vadd.f32 %v716, %v736
        %v747 = vadd.f32 %v717, %v736
        %v748 = vmul.f32 %v738, %v706
        %v749 = vmul.f32 %v739, %v707
        %v750 = vmul.f32 %v740, %v706
        %v751 = vmul.f32 %v741, %v707
        %v752 = vmul.f32 %v742, %v706
        %v753 = vmul.f32 %v743, %v707
        %v754 = vmul.f32 %v744, %v706
        %v755 = vmul.f32 %v745, %v707
        %v756 = vmul.f32 %v746, %v706
        %v757 = vmul.f32 %v747, %v707
        %758 = vset.pattern.permute.xlu0 1
        %759 = vperm.xlu0 %758, %v672
        %v760 = vpop.permute.xlu0 %759
        %762 = vset.pattern.permute.xlu0 1
        %763 = vperm.xlu0 %762, %v673
        %v764 = vpop.permute.xlu0 %763
        %766 = vset.pattern.permute.xlu0 1
        %767 = vperm.xlu0 %766, %v674
        %v768 = vpop.permute.xlu0 %767
        %770 = vset.pattern.permute.xlu0 1
        %771 = vperm.xlu0 %770, %v675
        %v772 = vpop.permute.xlu0 %771
        %774 = vset.pattern.permute.xlu0 1
        %775 = vperm.xlu0 %774, %v676
        %v776 = vpop.permute.xlu0 %775
        %v778 = vadd.f32 %v748, %v760
        %v779 = vadd.f32 %v749, %v760
        %v780 = vadd.f32 %v750, %v764
        %v781 = vadd.f32 %v751, %v764
        %v782 = vadd.f32 %v752, %v768
        %v783 = vadd.f32 %v753, %v768
        %v784 = vadd.f32 %v754, %v772
        %v785 = vadd.f32 %v755, %v772
        %v786 = vadd.f32 %v756, %v776
        %v787 = vadd.f32 %v757, %v776
        %v788 = vmul.f32 %v778, %v706
        %v789 = vmul.f32 %v779, %v707
        %v790 = vmul.f32 %v780, %v706
        %v791 = vmul.f32 %v781, %v707
        %v792 = vmul.f32 %v782, %v706
        %v793 = vmul.f32 %v783, %v707
        %v794 = vmul.f32 %v784, %v706
        %v795 = vmul.f32 %v785, %v707
        %v796 = vmul.f32 %v786, %v706
        %v797 = vmul.f32 %v787, %v707
        %798 = vset.pattern.permute.xlu0 0
        %799 = vperm.xlu0 %798, %v672
        %v800 = vpop.permute.xlu0 %799
        %802 = vset.pattern.permute.xlu0 0
        %803 = vperm.xlu0 %802, %v673
        %v804 = vpop.permute.xlu0 %803
        %806 = vset.pattern.permute.xlu0 0
        %807 = vperm.xlu0 %806, %v674
        %v808 = vpop.permute.xlu0 %807
        %810 = vset.pattern.permute.xlu0 0
        %811 = vperm.xlu0 %810, %v675
        %v812 = vpop.permute.xlu0 %811
        %814 = vset.pattern.permute.xlu0 0
        %815 = vperm.xlu0 %814, %v676
        %v816 = vpop.permute.xlu0 %815
        %v818 = vadd.f32 %v788, %v800
        %v819 = vadd.f32 %v789, %v800
        %v820 = vadd.f32 %v790, %v804
        %v821 = vadd.f32 %v791, %v804
        %v822 = vadd.f32 %v792, %v808
        %v823 = vadd.f32 %v793, %v808
        %v824 = vadd.f32 %v794, %v812
        %v825 = vadd.f32 %v795, %v812
        %v826 = vadd.f32 %v796, %v816
        %v827 = vadd.f32 %v797, %v816
        %v828 = vmul.f32 %v661, %v818
        %v829 = vmul.f32 %v662, %v819
        %v830 = vmul.f32 %v663, %v820
        %v831 = vmul.f32 %v664, %v821
        %v832 = vmul.f32 %v665, %v822
        %v833 = vmul.f32 %v666, %v823
        %v834 = vmul.f32 %v667, %v824
        %v835 = vmul.f32 %v668, %v825
        %v836 = vmul.f32 %v669, %v826
        %v837 = vmul.f32 %v670, %v827
        %838 = vst [vmem:[%s160] sm:$0xff] %v828
        %839 = vst [vmem:[%s160 + $0x8] sm:$0xff] %v829
        %840 = vst [vmem:[%s160 + $0x10] sm:$0xff] %v830
        %841 = vst [vmem:[%s160 + $0x18] sm:$0xff] %v831
        %842 = vst [vmem:[%s160 + $0x20] sm:$0xff] %v832
        %843 = vst [vmem:[%s160 + $0x28] sm:$0xff] %v833
        %844 = vst [vmem:[%s160 + $0x30] sm:$0xff] %v834
        %845 = vst [vmem:[%s160 + $0x38] sm:$0xff] %v835
        %846 = vst [vmem:[%s160 + $0x40] sm:$0xff] %v836
        %847 = vst [vmem:[%s160 + $0x48] sm:$0xff] %v837
        %s848 = sand.u32 %s90, 1
        %s849 = sand.u32 %s90, 1
        %s850 = smul.addr %s849, 80
        %s851 = scalar_lea.vmem [#allocation2], %s850
        // Predicated region
        $region33: #{basis_layer_pallas.1} parent=31 // pred_check
          %p852 = pneg %p100
        $region34: #{basis_layer_pallas.1} parent=31 // pred_check_branch
          %854 = sbr.rel (%p852) target = $region36
        $region35: #{basis_layer_pallas.1} parent=31 // pred_region
          %s855 = smul.u32 2, %s14
          %s856 = smul.addr %s855, 8
          %s857 = scalar_lea.vmem %s3, %s856
          // Predicated region
          $region37: #{basis_layer_pallas.1} parent=35 // pred_check
            _
          $region38: #{basis_layer_pallas.1} parent=35 // pred_check_branch
            %859 = sbr.rel (0) target = $region40
          $region39: #{basis_layer_pallas.1} parent=35 // pred_region
            // Predicated region
            $region41: #{basis_layer_pallas.1} parent=39 // pred_check
              _
            $region42: #{basis_layer_pallas.1} parent=39 // pred_check_branch
              %861 = sbr.rel (0) target = $region44
            $region43: #{basis_layer_pallas.1} parent=39 // pred_region
              loop: start=0, step=1, limit=1
              $region45: #{basis_layer_pallas.1} parent=43 // loop_pre_header
                _
              $region46: #{basis_layer_pallas.1} parent=43 // loop_header
                %s863 = sphi 0, %s867
                %p864 = scmp.ge.s32.totalorder %s863, 1
                %s868 = sphi %s851, %s851
                %s869 = sphi %s857, %s857
              $region47: #{basis_layer_pallas.1} parent=43 // loop_header_branch
                %866 = sbr.rel (%p864) target = $region51
              $region48: #{basis_layer_pallas.1} parent=43 // loop_body
                %v870 = vld [vmem:[%s868] sm:$0xff]
                %871 = vst [vmem:[%s869] sm:$0xff] %v870
                %v872 = vld [vmem:[%s868 + $0x8] sm:$0xff]
                %873 = vst [vmem:[%s869 + $0x8] sm:$0xff] %v872
                %v874 = vld [vmem:[%s868 + $0x10] sm:$0xff]
                %875 = vst [vmem:[%s869 + $0x40] sm:$0xff] %v874
                %v876 = vld [vmem:[%s868 + $0x18] sm:$0xff]
                %877 = vst [vmem:[%s869 + $0x48] sm:$0xff] %v876
                %v878 = vld [vmem:[%s868 + $0x20] sm:$0xff]
                %879 = vst [vmem:[%s869 + $0x80] sm:$0xff] %v878
                %v880 = vld [vmem:[%s868 + $0x28] sm:$0xff]
                %881 = vst [vmem:[%s869 + $0x88] sm:$0xff] %v880
                %v882 = vld [vmem:[%s868 + $0x30] sm:$0xff]
                %883 = vst [vmem:[%s869 + $0xc0] sm:$0xff] %v882
                %v884 = vld [vmem:[%s868 + $0x38] sm:$0xff]
                %885 = vst [vmem:[%s869 + $0xc8] sm:$0xff] %v884
                %v886 = vld [vmem:[%s868 + $0x40] sm:$0xff]
                %887 = vst [vmem:[%s869 + $0x100] sm:$0xff] %v886
                %v888 = vld [vmem:[%s868 + $0x48] sm:$0xff]
                %889 = vst [vmem:[%s869 + $0x108] sm:$0xff] %v888
              $region49: #{basis_layer_pallas.1} parent=43 // loop_footer
                %s867 = sadd.s32 1, %s863
              $region50: #{basis_layer_pallas.1} parent=43 // loop_footer_branch
                %862 = sbr.rel target = $region46
              $region51: #{basis_layer_pallas.1} parent=43 // loop_exit
                _
            $region44: #{basis_layer_pallas.1} parent=39 // pred_fallthru
              _
            // Predicated region
            $region52: #{basis_layer_pallas.1} parent=39 // pred_check
              _
            $region53: #{basis_layer_pallas.1} parent=39 // pred_check_branch
              %891 = sbr.rel target = $region55
            $region54: #{basis_layer_pallas.1} parent=39 // pred_region
              _
            $region55: #{basis_layer_pallas.1} parent=39 // pred_fallthru
              _
          $region40: #{basis_layer_pallas.1} parent=35 // pred_fallthru
            _
          %892 = vnop
        $region36: #{basis_layer_pallas.1} parent=31 // pred_fallthru
          _
      $region32: #{basis_layer_pallas.1} parent=5 // pred_fallthru
        _
      %p893 = scmp.le.s32.totalorder 2, %s9
      // Predicated region
      $region56: #{basis_layer_pallas.1} parent=5 // pred_check
        %p894 = pneg %p893
      $region57: #{basis_layer_pallas.1} parent=5 // pred_check_branch
        %896 = sbr.rel (%p894) target = $region59
      $region58: #{basis_layer_pallas.1} parent=5 // pred_region
        %s897 = ssub.s32 %s9, 2
        // Predicated region
        $region60: #{basis_layer_pallas.1} parent=58 // pred_check
          %p898 = pneg %p106
        $region61: #{basis_layer_pallas.1} parent=58 // pred_check_branch
          %900 = sbr.rel (%p898) target = $region63
        $region62: #{basis_layer_pallas.1} parent=58 // pred_region
          %s901 = sand.u32 %s91, 1
          %s902 = sand.u32 %s91, 1
          %s903 = smul.addr %s902, 80
          %s904 = scalar_lea.vmem [#allocation2], %s903
        $region63: #{basis_layer_pallas.1} parent=58 // pred_fallthru
          _
      $region59: #{basis_layer_pallas.1} parent=5 // pred_fallthru
        _
    $region6: #{basis_layer_pallas.1} parent=1 // loop_footer
      %s13 = sadd.s32 1, %s9
    $region7: #{basis_layer_pallas.1} parent=1 // loop_footer_branch
      %8 = sbr.rel target = $region3
    $region8: #{basis_layer_pallas.1} parent=1 // loop_exit
      _

</llo_original>
